<compile_context>
chip_gen: v7x
topology: tpu7x:2x2x1
jax: 0.10.0
libtpu: 0.0.40
codegen_flags: <defaults>
</compile_context>

<pallas_src>
import functools

import jax
import jax.numpy as jnp
from jax import lax
from jax.experimental import pallas as pl
from jax.experimental.pallas import tpu as pltpu


def _round_up(x, m):
    return ((x + m - 1) // m) * m


def _choose_lane_tile(dim_padded, t_max):
    """Largest multiple of 128 <= t_max that divides dim_padded (a 128-multiple)."""
    t = min(t_max, dim_padded)
    t = (t // 128) * 128
    while dim_padded % t != 0:
        t -= 128
    return t


def _choose_tm(B, tm_max):
    """Pick the M tile: minimal padding, 8-aligned."""
    b8 = _round_up(B, 8)
    if b8 <= tm_max:
        return b8
    best_t, best_pad = None, None
    for cand in (512, 448, 384, 320, 256, 192, 128):
        if cand > tm_max:
            continue
        pad = _round_up(B, cand) - B
        if best_pad is None or pad < best_pad:
            best_t, best_pad = cand, pad
    return best_t


# ---------------------------------------------------------------------------
# Kernels
# ---------------------------------------------------------------------------
def _linear_kernel_single_k(x_ref, w_ref, b_ref, o_ref):
    """Whole K in one tile: dot + bias straight to the output block."""
    acc = jnp.dot(x_ref[...], w_ref[...], preferred_element_type=jnp.float32)
    o_ref[...] = (acc + b_ref[...].astype(jnp.float32)).astype(o_ref.dtype)


def _linear_kernel_multi_k(x_ref, w_ref, b_ref, o_ref, acc_ref):
    """K-tiled reduction with a resident f32 accumulator."""
    k = pl.program_id(2)

    @pl.when(k == 0)
    def _init():
        acc_ref[...] = jnp.zeros_like(acc_ref)

    acc_ref[...] += jnp.dot(x_ref[...], w_ref[...],
                            preferred_element_type=jnp.float32)

    @pl.when(k == pl.num_programs(2) - 1)
    def _finalize():
        o_ref[...] = (acc_ref[...] + b_ref[...].astype(jnp.float32)).astype(o_ref.dtype)


# ---------------------------------------------------------------------------
# Wrapper
# ---------------------------------------------------------------------------
def classifier_forward(x, weight, bias, *, tm_max=512, tn_max=512, tk_max=512,
                       compute_dtype=jnp.bfloat16, allow_xla_fallback=True):
    """Linear forward: x [B, D_in], weight [D_out, D_in], bias [D_out] -> [B, D_out]."""
    B, D_in = x.shape
    D_out, D_in_w = weight.shape
    assert D_in_w == D_in and bias.shape == (D_out,)
    out_dtype = x.dtype

    # Tiny-problem fallback: fixed pallas_call launch/DMA-priming overhead
    # dominates sub-microsecond problems.
    if allow_xla_fallback and B * D_in * D_out <= (1 << 21):
        acc = jnp.dot(x.astype(compute_dtype), weight.astype(compute_dtype).T,
                      preferred_element_type=jnp.float32)
        return (acc + bias.astype(jnp.float32)).astype(out_dtype)

    # ---- tile selection (divisor-aware: no padded FLOPs beyond 128-alignment)
    Np = _round_up(D_out, 128)
    Kp = _round_up(D_in, 128)
    tn = _choose_lane_tile(Np, tn_max)
    tk = _choose_lane_tile(Kp, tk_max)
    tm = _choose_tm(B, tm_max)
    Bp = _round_up(B, tm)

    # Megacore nudge (v7x has 2 TCs): make sure a "parallel" axis has >= 2
    # iterations when it can be done without extra padding.
    if Bp // tm == 1 and Np // tn == 1 and Np % 256 == 0:
        tn = Np // 2

    gm, gn, gk = Bp // tm, Np // tn, Kp // tk

    # ---- operand prep.
    # NOTE: in a real model the weight transpose/cast/pad is a one-time init
    # cost, not a per-forward HBM copy; it is done inline here for a
    # self-contained script (XLA folds it under jit for constant weights).
    w_kn = weight.T.astype(compute_dtype)                       # [D_in, D_out]
    if (Kp, Np) != (D_in, D_out):
        w_kn = jnp.pad(w_kn, ((0, Kp - D_in), (0, Np - D_out)))
    x_c = x.astype(compute_dtype)                               # halve x DMA bytes
    if (Bp, Kp) != (B, D_in):
        x_c = jnp.pad(x_c, ((0, Bp - B), (0, Kp - D_in)))
    b_p = bias.astype(jnp.float32)
    if Np != D_out:
        b_p = jnp.pad(b_p, (0, Np - D_out))
    b2d = b_p.reshape(1, Np)

    comp_itemsize = jnp.dtype(compute_dtype).itemsize
    out_itemsize = jnp.dtype(out_dtype).itemsize
    cost = pl.CostEstimate(
        flops=2 * Bp * Np * Kp,
        transcendentals=0,
        # account for operand re-streaming across grid axes
        bytes_accessed=(Bp * Kp * gn + Kp * Np * gm) * comp_itemsize
                       + Np * 4 + Bp * Np * out_itemsize,
    )

    if gk == 1:
        kernel = _linear_kernel_single_k
        grid = (gm, gn)
        in_specs = [
            pl.BlockSpec((tm, tk), lambda i, j: (i, 0)),   # x tile
            pl.BlockSpec((tk, tn), lambda i, j: (0, j)),   # weight tile [K, N]
            pl.BlockSpec((1, tn), lambda i, j: (0, j)),    # bias tile
        ]
        out_specs = pl.BlockSpec((tm, tn), lambda i, j: (i, j))
        scratch_shapes = []
        dims = ("parallel", "parallel")
    else:
        kernel = _linear_kernel_multi_k
        grid = (gm, gn, gk)
        in_specs = [
            pl.BlockSpec((tm, tk), lambda i, j, k: (i, k)),  # x tile
            pl.BlockSpec((tk, tn), lambda i, j, k: (k, j)),  # weight tile [K, N]
            pl.BlockSpec((1, tn), lambda i, j, k: (0, j)),   # bias tile
        ]
        out_specs = pl.BlockSpec((tm, tn), lambda i, j, k: (i, j))
        scratch_shapes = [pltpu.VMEM((tm, tn), jnp.float32)]
        dims = ("parallel", "parallel", "arbitrary")

    out_p = pl.pallas_call(
        kernel,
        out_shape=jax.ShapeDtypeStruct((Bp, Np), out_dtype),
        grid_spec=pltpu.PrefetchScalarGridSpec(
            num_scalar_prefetch=0,
            grid=grid,
            in_specs=in_specs,
            out_specs=out_specs,
            scratch_shapes=scratch_shapes,
        ),
        compiler_params=pltpu.CompilerParams(
            dimension_semantics=dims,
            vmem_limit_bytes=48 * 1024 * 1024,   # safe on v5e/v6e/v7x
        ),
        cost_estimate=cost,
    )(x_c, w_kn, b2d)

    if (Bp, Np) != (B, D_out):
        out_p = out_p[:B, :D_out]
    return out_p


def _reference(x, weight, bias, compute_dtype=jnp.bfloat16):
    """Same bf16-operand / f32-accumulate semantics as the kernel path."""
    acc = jnp.dot(x.astype(compute_dtype), weight.astype(compute_dtype).T,
                  preferred_element_type=jnp.float32)
    return (acc + bias.astype(jnp.float32)).astype(x.dtype)


def _make_case(key, B, D_in, D_out):
    kx, kw, kb = jax.random.split(key, 3)
    bound = 1.0 / (D_in ** 0.5)
    x = jax.random.normal(kx, (B, D_in), dtype=jnp.float32)
    w = jax.random.uniform(kw, (D_out, D_in), minval=-bound, maxval=bound,
                           dtype=jnp.float32)
    b = jax.random.uniform(kb, (D_out,), minval=-bound, maxval=bound,
                           dtype=jnp.float32)
    return x, w, b


if __name__ == "__main__":
    key = jax.random.PRNGKey(0)
    k1, k2, k3 = jax.random.split(key, 3)

    # --- Small demo consistent with Classifier(input_dim=32, out_dim=16).
    #     Force the Pallas path (fallback would otherwise handle this size).
    x, w, b = _make_case(k1, B=8, D_in=32, D_out=16)
    out = jax.block_until_ready(
        classifier_forward(x, w, b, allow_xla_fallback=False))
    ref = _reference(x, w, b)
    assert out.shape == (8, 16)
    assert jnp.allclose(out, ref, atol=1e-3, rtol=1e-3)

    # --- Medium case: single-K fast path, divisor-aware tn (no N padding).
    x2, w2, b2 = _make_case(k2, B=256, D_in=512, D_out=384)
    out2 = jax.block_until_ready(classifier_forward(x2, w2, b2))
    ref2 = _reference(x2, w2, b2)
    assert out2.shape == (256, 384)
    assert jnp.allclose(out2, ref2, atol=1e-3, rtol=1e-3)

    # --- Larger case: multi-M, multi-K grid with accumulator + slicing back.
    x3, w3, b3 = _make_case(k3, B=1200, D_in=1280, D_out=300)
    out3 = jax.block_until_ready(classifier_forward(x3, w3, b3))
    ref3 = _reference(x3, w3, b3)
    assert out3.shape == (1200, 300)
    assert jnp.allclose(out3, ref3, atol=1e-3, rtol=1e-3)

    print("KERNEL_OK")
</pallas_src>

<mosaic_0001>
module attributes {stable_mosaic.version = 11 : i64} {
  func.func @_linear_kernel_single_k(%arg0: i32, %arg1: i32, %arg2: memref<8x128xbf16, #tpu.memory_space<vmem>>, %arg3: memref<128x128xbf16, #tpu.memory_space<vmem>>, %arg4: memref<1x128xf32, #tpu.memory_space<vmem>>, %arg5: memref<8x128xf32, #tpu.memory_space<vmem>>) attributes {dimension_semantics = [#tpu.dimension_semantics<parallel>, #tpu.dimension_semantics<parallel>], iteration_bounds = array<i64: 1, 1>, scalar_prefetch = 0 : i64, scratch_operands = 0 : i64, tpu.core_type = #tpu.core_type<tc>, window_params = [{transform_indices = @transform_0, window_bounds = array<i64: 8, 128>}, {transform_indices = @transform_1, window_bounds = array<i64: 128, 128>}, {transform_indices = @transform_2, window_bounds = array<i64: 1, 128>}, {transform_indices = @transform_3, window_bounds = array<i64: 8, 128>}]} {
    %c0 = arith.constant 0 : index
    %c0_0 = arith.constant 0 : index
    %0 = vector.load %arg2[%c0, %c0_0] : memref<8x128xbf16, #tpu.memory_space<vmem>>, vector<8x128xbf16>
    %c0_1 = arith.constant 0 : index
    %c0_2 = arith.constant 0 : index
    %1 = vector.load %arg3[%c0_1, %c0_2] : memref<128x128xbf16, #tpu.memory_space<vmem>>, vector<128x128xbf16>
    %cst = arith.constant dense<0.000000e+00> : vector<8x128xf32>
    %2 = tpu.matmul %0, %1, %cst {dimension_numbers = #tpu.dot_dimension_numbers<[1], [0], [0], [1], [0, 0, 1, 1], [], []>} : vector<8x128xbf16>, vector<128x128xbf16>, vector<8x128xf32> -> vector<8x128xf32>
    %c0_3 = arith.constant 0 : index
    %c0_4 = arith.constant 0 : index
    %3 = vector.load %arg4[%c0_3, %c0_4] : memref<1x128xf32, #tpu.memory_space<vmem>>, vector<1x128xf32>
    %4 = vector.broadcast %3 : vector<1x128xf32> to vector<8x128xf32>
    %5 = arith.addf %2, %4 : vector<8x128xf32>
    %c0_5 = arith.constant 0 : index
    %c0_6 = arith.constant 0 : index
    %6 = vector.load %arg5[%c0_5, %c0_6] : memref<8x128xf32, #tpu.memory_space<vmem>>, vector<8x128xf32>
    tpu.vector_store %arg5[%c0_5, %c0_6], %5 {strides = array<i32>} : memref<8x128xf32, #tpu.memory_space<vmem>>, vector<8x128xf32>,
    return
  }
  func.func @transform_0(%arg0: i32, %arg1: i32) -> (i32, i32) {
    %c0_i32 = arith.constant 0 : i32
    %c0_i32_0 = arith.constant 0 : i32
    return %arg0, %c0_i32 : i32, i32
  }
  func.func @transform_1(%arg0: i32, %arg1: i32) -> (i32, i32) {
    %c0_i32 = arith.constant 0 : i32
    %c0_i32_0 = arith.constant 0 : i32
    return %c0_i32, %arg1 : i32, i32
  }
  func.func @transform_2(%arg0: i32, %arg1: i32) -> (i32, i32) {
    %c0_i32 = arith.constant 0 : i32
    %c0_i32_0 = arith.constant 0 : i32
    return %c0_i32, %arg1 : i32, i32
  }
  func.func @transform_3(%arg0: i32, %arg1: i32) -> (i32, i32) {
    %c0_i32 = arith.constant 0 : i32
    return %arg0, %arg1 : i32, i32
  }
}

</mosaic_0001>

<llo_original>
// kernel: tpu_custom_call.1
$region0: #{tpu_custom_call.1}
  #allocation0 [shape = 'u32[]', space=smem, size = 0x4, offset = 0x4, fixed_abs, tag = 'smem constant byte address 0x4 - core index']
  #allocation1 [shape = 'u32[144,128]{1,0:T(1,128)}', space=vmem, size = 0x12000, scoped, tag = 'internal scratch']
  %s0 = inlined_call_operand.hbm [shape: bf16[8,128], index: 0, kind: input, shape index: {}]
  %s1 = inlined_call_operand.hbm [shape: bf16[128,128], index: 1, kind: input, shape index: {}]
  %s2 = inlined_call_operand.vmem [shape: f32[1,128], index: 2, kind: input, shape index: {}]
  %s3 = inlined_call_operand.hbm [shape: f32[8,128], index: 3, kind: output, shape index: {}]
  %s4 = sld [smem:[#allocation0]]
  $region30: #{tpu_custom_call.1} parent=0
    _
  %s6 = ssub.s32 1, %s4
  %s7 = scalar_select 0, %s6, %s4
  $region1: #{tpu_custom_call.1} parent=0
    #allocation2 [shape = 'u8[2048]{0}', space=vmem, size = 0x800, scoped, tag = 'input window, operand 0, single buffered']
    #allocation3 [shape = 's32[1]{0}', space=sflag, size = 0x4, scoped, tag = 'scoped memory for tpu_custom_call.1']
    #allocation4 [shape = 's32[1]{0}', space=sflag, size = 0x4, scoped, tag = 'scoped memory for tpu_custom_call.1']
    #allocation5 [shape = 'u8[32768]{0}', space=vmem, size = 0x8000, scoped, tag = 'input window, operand 1, single buffered']
    #allocation6 [shape = 's32[1]{0}', space=sflag, size = 0x4, scoped, tag = 'scoped memory for tpu_custom_call.1']
    #allocation7 [shape = 'u8[4096]{0}', space=vmem, size = 0x1000, scoped, tag = 'output window, operand 0, single buffered']
    %8 = vsyncpa [#allocation3], 0
    %9 = vsyncpa [#allocation6], 0
    %10 = vsyncpa [#allocation4], 0
    // Predicated region
    $region2: #{tpu_custom_call.1} parent=1 // pred_check
      _
    $region3: #{tpu_custom_call.1} parent=1 // pred_check_branch
      %12 = sbr.rel (0) target = $region5
    $region4: #{tpu_custom_call.1} parent=1 // pred_region
      %s14 = ssub.s32 64, 64
      %15 = vsyncadd [#allocation3], %s14
      %s17 = sshll.u32 [#allocation2], 4
      %s18 = int_to_ptr.vmem [resolvable:$true] %s17
      %20 = dma.hbm_to_vmem [thread:$0]  %s0, 64, %s18, [#allocation3]
    $region5: #{tpu_custom_call.1} parent=1 // pred_fallthru
      _
    // Predicated region
    $region6: #{tpu_custom_call.1} parent=1 // pred_check
      _
    $region7: #{tpu_custom_call.1} parent=1 // pred_check_branch
      %22 = sbr.rel (0) target = $region9
    $region8: #{tpu_custom_call.1} parent=1 // pred_region
      %s24 = ssub.s32 1024, 1024
      %25 = vsyncadd [#allocation6], %s24
      %s26 = sshll.u32 [#allocation5], 4
      %s27 = int_to_ptr.vmem [resolvable:$true] %s26
      %32 = dma.hbm_to_vmem [thread:$0]  %s1, 1024, %s27, [#allocation6], 64, 64, 4
    $region9: #{tpu_custom_call.1} parent=1 // pred_fallthru
      _
    // Predicated region
    $region10: #{tpu_custom_call.1} parent=1 // pred_check
      _
    $region11: #{tpu_custom_call.1} parent=1 // pred_check_branch
      %34 = sbr.rel (0) target = $region13
    $region12: #{tpu_custom_call.1} parent=1 // pred_region
      _
    $region13: #{tpu_custom_call.1} parent=1 // pred_fallthru
      _
    // Predicated region
    $region14: #{tpu_custom_call.1} parent=1 // pred_check
      _
    $region15: #{tpu_custom_call.1} parent=1 // pred_check_branch
      %36 = sbr.rel (0) target = $region17
    $region16: #{tpu_custom_call.1} parent=1 // pred_region
      %37 = dma.done [#allocation3], 64
    $region17: #{tpu_custom_call.1} parent=1 // pred_fallthru
      _
    // Predicated region
    $region18: #{tpu_custom_call.1} parent=1 // pred_check
      _
    $region19: #{tpu_custom_call.1} parent=1 // pred_check_branch
      %39 = sbr.rel (0) target = $region21
    $region20: #{tpu_custom_call.1} parent=1 // pred_region
      %40 = dma.done [#allocation6], 1024
    $region21: #{tpu_custom_call.1} parent=1 // pred_fallthru
      _
    %v42 = vld [vmem:[#allocation2] sm:$0xf]
    %v43 = vld [vmem:[#allocation5] sm:$0xf]
    %v44 = vld [vmem:[#allocation5 + $0x4] sm:$0xf]
    %v45 = vld [vmem:[#allocation5 + $0x8] sm:$0xf]
    %v46 = vld [vmem:[#allocation5 + $0xc] sm:$0xf]
    %v47 = vld [vmem:[#allocation5 + $0x10] sm:$0xf]
    %v48 = vld [vmem:[#allocation5 + $0x14] sm:$0xf]
    %v49 = vld [vmem:[#allocation5 + $0x18] sm:$0xf]
    %v50 = vld [vmem:[#allocation5 + $0x1c] sm:$0xf]
    %v51 = vld [vmem:[#allocation5 + $0x20] sm:$0xf]
    %v52 = vld [vmem:[#allocation5 + $0x24] sm:$0xf]
    %v53 = vld [vmem:[#allocation5 + $0x28] sm:$0xf]
    %v54 = vld [vmem:[#allocation5 + $0x2c] sm:$0xf]
    %v55 = vld [vmem:[#allocation5 + $0x30] sm:$0xf]
    %v56 = vld [vmem:[#allocation5 + $0x34] sm:$0xf]
    %v57 = vld [vmem:[#allocation5 + $0x38] sm:$0xf]
    %v58 = vld [vmem:[#allocation5 + $0x3c] sm:$0xf]
    %v59 = vld [vmem:[%s2] sm:$0x1]
    %v61 = vlaneseq
    %v62 = vshrl.u32 %v61, 7
    %v63 = vsub.s32 0, %v62
    %v64 = vrot.slane %v59, %v63
    %v82 = vunpack.c.l.b16 %v43
    %v83 = vunpack.c.l.b16 %v44
    %v84 = vunpack.c.l.b16 %v45
    %v85 = vunpack.c.l.b16 %v46
    %v86 = vunpack.c.l.b16 %v47
    %v87 = vunpack.c.l.b16 %v48
    %v88 = vunpack.c.l.b16 %v49
    %v89 = vunpack.c.l.b16 %v50
    %v90 = vunpack.c.l.b16 %v51
    %v91 = vunpack.c.l.b16 %v52
    %v92 = vunpack.c.l.b16 %v53
    %v93 = vunpack.c.l.b16 %v54
    %v94 = vunpack.c.l.b16 %v55
    %v95 = vunpack.c.l.b16 %v56
    %v96 = vunpack.c.l.b16 %v57
    %v97 = vunpack.c.l.b16 %v58
    %v98 = vpack.c.b16 %v83, %v82
    %v99 = vpack.c.b16 %v85, %v84
    %v100 = vpack.c.b16 %v87, %v86
    %v101 = vpack.c.b16 %v89, %v88
    %v102 = vpack.c.b16 %v91, %v90
    %v103 = vpack.c.b16 %v93, %v92
    %v104 = vpack.c.b16 %v95, %v94
    %v105 = vpack.c.b16 %v97, %v96
    %114 = vmatprep.subr.bf16.mxu0 0
    %115 = vmatpush1.bf16.msra.mxu0 %v98
    %116 = vmatprep.subr.bf16.mxu0 0
    %117 = vmatpush1.bf16.msra.mxu0 %v99
    %118 = vmatprep.subr.bf16.mxu0 0
    %119 = vmatpush1.bf16.msra.mxu0 %v100
    %120 = vmatprep.subr.bf16.mxu0 0
    %121 = vmatpush1.bf16.msra.mxu0 %v101
    %122 = vmatprep.subr.bf16.mxu0 0
    %123 = vmatpush1.bf16.msra.mxu0 %v102
    %124 = vmatprep.subr.bf16.mxu0 0
    %125 = vmatpush1.bf16.msra.mxu0 %v103
    %126 = vmatprep.subr.bf16.mxu0 0
    %127 = vmatpush1.bf16.msra.mxu0 %v104
    %128 = vmatprep.subr.bf16.mxu0 0
    %129 = vmatpush1.bf16.msra.mxu0 %v105
    %130 = vmatprep.subr.bf16.mxu0 0
    %131 = vmatpush1.bf16.msra.mxu0 0
    %132 = vmatprep.subr.bf16.mxu0 0
    %133 = vmatpush1.bf16.msra.mxu0 0
    %134 = vmatprep.subr.bf16.mxu0 0
    %135 = vmatpush1.bf16.msra.mxu0 0
    %136 = vmatprep.subr.bf16.mxu0 0
    %137 = vmatpush1.bf16.msra.mxu0 0
    %138 = vmatprep.subr.bf16.mxu0 0
    %139 = vmatpush1.bf16.msra.mxu0 0
    %140 = vmatprep.subr.bf16.mxu0 0
    %141 = vmatpush1.bf16.msra.mxu0 0
    %142 = vmatprep.subr.bf16.mxu0 0
    %143 = vmatpush1.bf16.msra.mxu0 0
    %144 = vmatprep.subr.bf16.mxu0 0
    %145 = vmatpush1.bf16.msra.mxu0 0
    %146 = vmatprep.mubr.bf16.mxu0 0
    %147 = vmatmul.mubr.bf16.gmra.mrb[0].mxu0 %v42
    %v148 = vpop.f32.mrb[0].mxu0
    %v149 = vadd.f32 %v64, %v148
    %v150 = vpop.f32.mrb[0].mxu0
    %v151 = vpop.f32.mrb[0].mxu0
    %v152 = vpop.f32.mrb[0].mxu0
    %153 = vdwg.mxu0
    %154 = vst [vmem:[#allocation7] sm:$0xff] %v149
    // Predicated region
    $region22: #{tpu_custom_call.1} parent=1 // pred_check
      _
    $region23: #{tpu_custom_call.1} parent=1 // pred_check_branch
      %156 = sbr.rel (0) target = $region25
    $region24: #{tpu_custom_call.1} parent=1 // pred_region
      %s158 = ssub.s32 128, 128
      %159 = vsyncadd [#allocation4], %s158
      %s161 = sshll.u32 [#allocation7], 4
      %s162 = int_to_ptr.vmem [resolvable:$true] %s161
      %164 = dma.vmem_to_hbm [thread:$0]  %s162, 128, %s3, [#allocation4]
    $region25: #{tpu_custom_call.1} parent=1 // pred_fallthru
      _
    // Predicated region
    $region26: #{tpu_custom_call.1} parent=1 // pred_check
      _
    $region27: #{tpu_custom_call.1} parent=1 // pred_check_branch
      %166 = sbr.rel (0) target = $region29
    $region28: #{tpu_custom_call.1} parent=1 // pred_region
      %167 = dma.done [#allocation4], 128
    $region29: #{tpu_custom_call.1} parent=1 // pred_fallthru
      _
    %168 = vsyncpa [#allocation3], 1
    %169 = vsyncpa [#allocation6], 1
    %170 = vsyncpa [#allocation4], 1

</llo_original>
